<compile_context>
chip_gen: v5e
topology: v5e:2x2
jax: 0.10.0
libtpu: 0.0.40
codegen_flags: <defaults>
</compile_context>

<pallas_src>
import functools

import jax
import jax.numpy as jnp
from jax import lax
from jax.experimental import pallas as pl
from jax.experimental.pallas import tpu as pltpu


# ---------------------------------------------------------------------------
# Generation-aware tiling helpers
# ---------------------------------------------------------------------------
def _vmem_budgets():
    """(per-block byte budget, scoped VMEM limit) derived from the chip's VMEM."""
    try:
        vmem = pltpu.get_tpu_info().vmem_capacity_bytes
    except Exception:                                    # pragma: no cover
        vmem = 64 * 1024 * 1024                          # conservative (v7x-sized)
    limit = int(min((vmem * 3) // 4, 96 * 1024 * 1024))  # ~48 MiB on v7x, 96 MiB on v5e/v6e
    budget = int(max(2 * 1024 * 1024, limit // 12))      # per (un-double-buffered) input block
    return budget, limit


def _pick_tile(total, unit_bytes, budget, *, valid, n_other=1, min_steps=4):
    """Largest divisor of `total` that satisfies `valid`, fits `budget`, and (when
    possible) leaves >= `min_steps` grid steps for pipelining / megacore split."""
    cands = sorted(d for d in range(1, total + 1) if total % d == 0 and valid(d))
    if not cands:
        cands = [total]
    fitting = [d for d in cands if d * unit_bytes <= budget] or cands[:1]
    good = [d for d in fitting if n_other * (total // d) >= min_steps]
    return max(good) if good else min(fitting)


# ---------------------------------------------------------------------------
# Kernels
# ---------------------------------------------------------------------------
def _conv3x3_s2_kernel(body_ref, halo_ref, wm_ref, wb_ref, b_ref, o_ref, acc_ref,
                       *, t_rows, wo, c_out):
    """3x3 conv, stride 2, padding 1, on a band of `t_rows` output rows.

    body_ref: (1, t, 2, Wo, 2*Cin)  folded input, body[p, a, q, b*C+c] = x[2p+a, 2q+b, c]
    halo_ref: (1, 1, 1, Wo, 2*Cin)  odd input row just above this band (prev band's last)
    wm_ref:   (2*Cin, 2*Cout)       fused kh=1 weight  [A | B]
    wb_ref:   (2*Cin, 4*Cout)       fused kh=2 / kh=0-of-next-row weight [A2|B2|A0|B0]
              A columns: kw=1 tap on the even column + kw=2 tap on the odd column (at q)
              B columns: kw=0 tap on the odd column (consumed at q+1)
    b_ref:    (1, Cout) f32 bias
    o_ref:    (1, t*Wo, Cout)
    acc_ref:  (t*Wo, 2*Cout) f32 scratch accumulator
    """
    m = t_rows * wo
    two_co = 2 * c_out
    k = body_ref.shape[4]

    plane_mid = body_ref[0, :, 0, :, :].reshape(m, k)    # input rows 2p   -> kh=1 taps
    plane_bot = body_ref[0, :, 1, :, :].reshape(m, k)    # input rows 2p+1 -> kh=2 / kh=0

    # Two big MXU contractions with f32 accumulation (no input-plane concat).
    acc_mid = jnp.dot(plane_mid, wm_ref[...], preferred_element_type=jnp.float32)  # (m, 2Co)
    acc_bot = jnp.dot(plane_bot, wb_ref[...], preferred_element_type=jnp.float32)  # (m, 4Co)

    # kh=1 / kh=2 contributions land on their own output row.
    acc_ref[...] = acc_mid + acc_bot[:, :two_co]
    # kh=0 contribution of input row 2p+1 lands one output row further down (p+1).
    if t_rows > 1:
        acc_ref[wo:, :] += acc_bot[: m - wo, two_co:]

    # First output row of the band takes its kh=0 taps from the halo row; the very
    # first band sees the zero top padding instead (skip the dot entirely).
    @pl.when(pl.program_id(1) > 0)
    def _():
        acc_ref[:wo, :] += jnp.dot(halo_ref[0, 0, 0], wb_ref[:, two_co:],
                                   preferred_element_type=jnp.float32)

    # Combine the kw phases: out[p, q] = A[p, q] + B[p, q-1]  (B[p, -1] = 0: left pad).
    acc = acc_ref[...].reshape(t_rows, wo, two_co)
    out_a = acc[:, :, :c_out]
    if wo > 1:
        out = jnp.concatenate(
            [out_a[:, :1, :], out_a[:, 1:, :] + acc[:, : wo - 1, c_out:two_co]], axis=1)
    else:
        out = out_a
    out = out + b_ref[...]
    o_ref[0] = out.reshape(m, c_out).astype(o_ref.dtype)


def _avgpool2x2_s2_kernel(x_ref, p_ref, o_ref):
    """2x2 average pool, stride 2, directly on an NCHW row band.

    x_ref: (1, C, t, 2W)  lane j holds x[.., 2p + j // W, j % W]
    p_ref: (2W, Wo)       constant pooling matrix (0.25 at [r*W + w, w // 2])
    o_ref: (1, C, t, Wo)
    """
    c, t, w2 = x_ref.shape[1], x_ref.shape[2], x_ref.shape[3]
    x = x_ref[0].reshape(c * t, w2)
    pooled = jnp.dot(x, p_ref[...], preferred_element_type=jnp.float32)   # (c*t, Wo)
    o_ref[0] = pooled.reshape(c, t, o_ref.shape[3]).astype(o_ref.dtype)


# ---------------------------------------------------------------------------
# Wrappers
# ---------------------------------------------------------------------------
@functools.partial(jax.jit, static_argnames=("row_tile",))
def downsample_conv2d(x_nchw, w_oihw, bias, *, row_tile=None):
    N, C, H, W = x_nchw.shape
    Cout = w_oihw.shape[0]
    assert H % 2 == 0 and W % 2 == 0, "even spatial dims expected"
    # TODO(synk): odd H/W (allowed by PyTorch's stride-2 / pad-1 conv) not handled.
    Ho, Wo = H // 2, W // 2

    # Single real data-movement pass: NCHW -> NHWC.  No jnp.pad: the padded image is
    # never materialized in HBM; boundary rows/cols are handled inside the kernel and
    # the folded width is exactly Wo (sublane-aligned for power-of-two sizes).
    x = jnp.transpose(x_nchw, (0, 2, 3, 1))
    xr = x.reshape(N, Ho, 2, Wo, 2 * C)     # free: xr[n,p,a,q,b*C+c] = x[n,2p+a,2q+b,c]

    # Fused weights, kept in the activation dtype for the MXU.
    #  A columns consume (even col, odd col) of pair q  -> kw=1, kw=2 taps at q.
    #  B columns consume the odd col of pair q          -> kw=0 tap, added at q+1.
    #  The bottom (odd-row) weight also carries the kh=0 taps of the next output row,
    #  so the whole 3x3 conv is two MXU contractions per tile.
    w_hwio = jnp.transpose(w_oihw, (2, 3, 1, 0)).astype(x.dtype)      # (kh, kw, Cin, Cout)
    zeros = jnp.zeros((C, Cout), x.dtype)

    def fused(kh):
        a_cols = jnp.concatenate([w_hwio[kh, 1], w_hwio[kh, 2]], axis=0)   # (2C, Co)
        b_cols = jnp.concatenate([zeros, w_hwio[kh, 0]], axis=0)           # (2C, Co)
        return jnp.concatenate([a_cols, b_cols], axis=1)                   # (2C, 2Co)

    w_mid = fused(1)                                                       # (2C, 2Co)
    w_bot = jnp.concatenate([fused(2), fused(0)], axis=1)                  # (2C, 4Co)
    b2 = bias.reshape(1, Cout).astype(jnp.float32)

    budget, vmem_limit = _vmem_budgets()
    pair_bytes = 2 * Wo * 2 * C * x.dtype.itemsize        # one body row-pair
    t = row_tile if row_tile is not None else _pick_tile(
        Ho, pair_bytes, budget,
        valid=lambda d: d == Ho or (d * Wo) % 8 == 0, n_other=N)
    assert Ho % t == 0 and (t == Ho or (t * Wo) % 8 == 0)

    # Large resident weights: no point double-buffering a constant block (it would
    # double the VMEM footprint); small weights keep the default pipelining.
    weight_bytes = (w_mid.size + w_bot.size) * w_mid.dtype.itemsize
    single_buffer = weight_bytes > (2 << 20)

    def wspec(shape):
        idx = lambda n, i: (0,) * len(shape)
        if single_buffer:
            return pl.BlockSpec(shape, idx, pipeline_mode=pl.Buffered(1))
        return pl.BlockSpec(shape, idx)

    kernel = functools.partial(_conv3x3_s2_kernel, t_rows=t, wo=Wo, c_out=Cout)
    out2d = pl.pallas_call(
        kernel,
        out_shape=jax.ShapeDtypeStruct((N, Ho * Wo, Cout), x_nchw.dtype),
        grid=(N, Ho // t),
        in_specs=[
            # body band of t output rows (two input rows per output row)
            pl.BlockSpec((1, t, 2, Wo, 2 * C), lambda n, i: (n, i, 0, 0, 0)),
            # 1-row halo: the odd input row just above this band (clamped for band 0,
            # where the kernel skips it -> zero top padding)
            pl.BlockSpec((1, 1, 1, Wo, 2 * C),
                         lambda n, i: (n, jnp.maximum(i * t - 1, 0), 1, 0, 0)),
            wspec((2 * C, 2 * Cout)),
            wspec((2 * C, 4 * Cout)),
            wspec((1, Cout)),
        ],
        out_specs=pl.BlockSpec((1, t * Wo, Cout), lambda n, i: (n, i, 0)),
        scratch_shapes=[pltpu.VMEM((t * Wo, 2 * Cout), jnp.float32)],
        compiler_params=pltpu.CompilerParams(
            dimension_semantics=("parallel", "parallel"),
            vmem_limit_bytes=vmem_limit),
    )(xr, xr, w_mid, w_bot, b2)

    out_nhwc = out2d.reshape(N, Ho, Wo, Cout)              # free
    return jnp.transpose(out_nhwc, (0, 3, 1, 2))           # 4x smaller than the input


@functools.partial(jax.jit, static_argnames=("row_tile",))
def downsample_avgpool2d(x_nchw, *, row_tile=None):
    N, C, H, W = x_nchw.shape
    assert H % 2 == 0 and W % 2 == 0, "even spatial dims expected"
    Ho, Wo = H // 2, W // 2

    # Free NCHW reshape: lane j of xr[..., p, :] holds x[..., 2p + j // W, j % W].
    # No wrapper transpose / pad -> the only HBM traffic is x in + pooled out.
    xr = x_nchw.reshape(N, C, Ho, 2 * W)

    # 2x2 pooling as one small MXU contraction over the folded lane axis.
    lane = jnp.arange(2 * W) % W
    pmat = jnp.where((lane[:, None] // 2) == jnp.arange(Wo)[None, :], 0.25, 0.0)
    pmat = pmat.astype(x_nchw.dtype)

    budget, vmem_limit = _vmem_budgets()
    band_bytes = C * 2 * W * x_nchw.dtype.itemsize          # one output row of the block
    t = row_tile if row_tile is not None else _pick_tile(
        Ho, band_bytes, budget,
        valid=lambda d: d == Ho or d % 8 == 0, n_other=N)
    assert Ho % t == 0 and (t == Ho or t % 8 == 0)

    return pl.pallas_call(
        _avgpool2x2_s2_kernel,
        out_shape=jax.ShapeDtypeStruct((N, C, Ho, Wo), x_nchw.dtype),
        grid=(N, Ho // t),
        in_specs=[
            pl.BlockSpec((1, C, t, 2 * W), lambda n, i: (n, 0, i, 0)),
            pl.BlockSpec((2 * W, Wo), lambda n, i: (0, 0)),
        ],
        out_specs=pl.BlockSpec((1, C, t, Wo), lambda n, i: (n, 0, i, 0)),
        compiler_params=pltpu.CompilerParams(
            dimension_semantics=("parallel", "parallel"),
            vmem_limit_bytes=vmem_limit),
    )(xr, pmat)


class Downsample:
    """JAX/Pallas port of the PyTorch Downsample module (dims=2 only)."""

    def __init__(self, channels, use_conv, dims=2, out_channels=None, *, key=None):
        assert dims == 2, "only dims=2 implemented"
        self.channels = channels
        self.out_channels = out_channels or channels
        self.use_conv = use_conv
        if use_conv:
            key = key if key is not None else jax.random.PRNGKey(0)
            kw, kb = jax.random.split(key)
            fan_in = channels * 9
            scale = 1.0 / (fan_in ** 0.5)
            # Conv2d(channels, out_channels, 3, stride=2, padding=1): OIHW weights
            self.weight = scale * jax.random.normal(
                kw, (self.out_channels, channels, 3, 3), jnp.float32)
            self.bias = scale * jax.random.normal(kb, (self.out_channels,), jnp.float32)
        else:
            assert self.channels == self.out_channels

    def __call__(self, x):
        assert x.shape[1] == self.channels
        if self.use_conv:
            return downsample_conv2d(x, self.weight, self.bias)
        return downsample_avgpool2d(x)


# ---------------------------------------------------------------------------
# Demo / correctness check
# ---------------------------------------------------------------------------
if __name__ == "__main__":
    key = jax.random.PRNGKey(0)
    kx, kp, kp2, kx2 = jax.random.split(key, 4)
    N, C, H, W = 2, 4, 16, 16
    x = jax.random.normal(kx, (N, C, H, W), jnp.float32)

    def conv_ref(x_, w_, b_):
        y = lax.conv_general_dilated(
            x_, w_, window_strides=(2, 2), padding=((1, 1), (1, 1)),
            dimension_numbers=("NCHW", "OIHW", "NCHW"),
            precision=lax.Precision.HIGHEST)
        return y + b_.reshape(1, -1, 1, 1)

    # use_conv=True path (conv 3x3, stride 2, padding 1), Cout == Cin
    ds_conv = Downsample(channels=C, use_conv=True, dims=2, key=kp)
    y_conv = jax.block_until_ready(ds_conv(x))
    assert y_conv.shape == (N, C, H // 2, W // 2)
    assert jnp.allclose(y_conv, conv_ref(x, ds_conv.weight, ds_conv.bias),
                        atol=1e-4, rtol=1e-4)

    # Cout != Cin with a forced small row tile (exercises the inter-band halo path)
    ds_conv2 = Downsample(channels=C, use_conv=True, dims=2, out_channels=8, key=kp2)
    y_conv2 = jax.block_until_ready(
        downsample_conv2d(x, ds_conv2.weight, ds_conv2.bias, row_tile=2))
    assert y_conv2.shape == (N, 8, H // 2, W // 2)
    assert jnp.allclose(y_conv2, conv_ref(x, ds_conv2.weight, ds_conv2.bias),
                        atol=1e-4, rtol=1e-4)

    # use_conv=False path (avg pool 2x2, stride 2)
    ds_pool = Downsample(channels=C, use_conv=False, dims=2)
    y_pool = jax.block_until_ready(ds_pool(x))
    ref_pool = x.reshape(N, C, H // 2, 2, W // 2, 2).mean(axis=(3, 5))
    assert y_pool.shape == (N, C, H // 2, W // 2)
    assert jnp.allclose(y_pool, ref_pool, atol=1e-5, rtol=1e-5)

    # Larger spatial size with a forced row tile (multi-band pool grid)
    x2 = jax.random.normal(kx2, (N, C, 32, 32), jnp.float32)
    y_pool2 = jax.block_until_ready(downsample_avgpool2d(x2, row_tile=8))
    ref_pool2 = x2.reshape(N, C, 16, 2, 16, 2).mean(axis=(3, 5))
    assert jnp.allclose(y_pool2, ref_pool2, atol=1e-5, rtol=1e-5)

    print("KERNEL_OK")
</pallas_src>

<mosaic_0001>
module attributes {stable_mosaic.version = 11 : i64} {
  func.func @_conv3x3_s2_kernel(%arg0: i32, %arg1: i32, %arg2: memref<1x4x2x8x8xf32, #tpu.memory_space<vmem>>, %arg3: memref<1x1x1x8x8xf32, #tpu.memory_space<vmem>>, %arg4: memref<8x8xf32, #tpu.memory_space<vmem>>, %arg5: memref<8x16xf32, #tpu.memory_space<vmem>>, %arg6: memref<1x4xf32, #tpu.memory_space<vmem>>, %arg7: memref<1x32x4xf32, #tpu.memory_space<vmem>>, %arg8: memref<32x8xf32, #tpu.memory_space<vmem>>) attributes {dimension_semantics = [#tpu.dimension_semantics<parallel>, #tpu.dimension_semantics<parallel>], iteration_bounds = array<i64: 2, 2>, scalar_prefetch = 0 : i64, scratch_operands = 1 : i64, tpu.core_type = #tpu.core_type<tc>, window_params = [{transform_indices = @transform_0, window_bounds = array<i64: 1, 4, 2, 8, 8>}, {transform_indices = @transform_1, window_bounds = array<i64: 1, 1, 1, 8, 8>}, {pipeline_mode = #tpu.pipeline_mode<synchronous>, transform_indices = @transform_2, window_bounds = array<i64: 8, 8>}, {pipeline_mode = #tpu.pipeline_mode<synchronous>, transform_indices = @transform_3, window_bounds = array<i64: 8, 16>}, {pipeline_mode = #tpu.pipeline_mode<synchronous>, transform_indices = @transform_4, window_bounds = array<i64: 1, 4>}, {transform_indices = @transform_5, window_bounds = array<i64: 1, 32, 4>}]} {
    %c0 = arith.constant 0 : index
    %c0_0 = arith.constant 0 : index
    %c0_1 = arith.constant 0 : index
    %c0_2 = arith.constant 0 : index
    %c0_3 = arith.constant 0 : index
    %0 = vector.load %arg2[%c0, %c0_0, %c0_1, %c0_2, %c0_3] : memref<1x4x2x8x8xf32, #tpu.memory_space<vmem>>, vector<1x4x1x8x8xf32>
    %1 = vector.shape_cast %0 : vector<1x4x1x8x8xf32> to vector<4x8x8xf32>
    %2 = vector.shape_cast %1 : vector<4x8x8xf32> to vector<32x8xf32>
    %c0_4 = arith.constant 0 : index
    %c0_5 = arith.constant 0 : index
    %c1 = arith.constant 1 : index
    %c0_6 = arith.constant 0 : index
    %c0_7 = arith.constant 0 : index
    %3 = vector.load %arg2[%c0_4, %c0_5, %c1, %c0_6, %c0_7] : memref<1x4x2x8x8xf32, #tpu.memory_space<vmem>>, vector<1x4x1x8x8xf32>
    %4 = vector.shape_cast %3 : vector<1x4x1x8x8xf32> to vector<4x8x8xf32>
    %5 = vector.shape_cast %4 : vector<4x8x8xf32> to vector<32x8xf32>
    %c0_8 = arith.constant 0 : index
    %c0_9 = arith.constant 0 : index
    %6 = vector.load %arg4[%c0_8, %c0_9] : memref<8x8xf32, #tpu.memory_space<vmem>>, vector<8x8xf32>
    %cst = arith.constant dense<0.000000e+00> : vector<32x8xf32>
    %7 = tpu.matmul %2, %6, %cst {dimension_numbers = #tpu.dot_dimension_numbers<[1], [0], [0], [1], [0, 0, 1, 1], [], []>} : vector<32x8xf32>, vector<8x8xf32>, vector<32x8xf32> -> vector<32x8xf32>
    %c0_10 = arith.constant 0 : index
    %c0_11 = arith.constant 0 : index
    %8 = vector.load %arg5[%c0_10, %c0_11] : memref<8x16xf32, #tpu.memory_space<vmem>>, vector<8x16xf32>
    %cst_12 = arith.constant dense<0.000000e+00> : vector<32x16xf32>
    %9 = tpu.matmul %5, %8, %cst_12 {dimension_numbers = #tpu.dot_dimension_numbers<[1], [0], [0], [1], [0, 0, 1, 1], [], []>} : vector<32x8xf32>, vector<8x16xf32>, vector<32x16xf32> -> vector<32x16xf32>
    %10 = vector.extract_strided_slice %9 {offsets = [0, 0], sizes = [32, 8], strides = [1, 1]} : vector<32x16xf32> to vector<32x8xf32>
    %11 = arith.addf %7, %10 : vector<32x8xf32>
    %c0_13 = arith.constant 0 : index
    %c0_14 = arith.constant 0 : index
    %12 = vector.load %arg8[%c0_13, %c0_14] : memref<32x8xf32, #tpu.memory_space<vmem>>, vector<32x8xf32>
    tpu.vector_store %arg8[%c0_13, %c0_14], %11 {strides = array<i32>} : memref<32x8xf32, #tpu.memory_space<vmem>>, vector<32x8xf32>,
    %c8 = arith.constant 8 : index
    %c0_15 = arith.constant 0 : index
    %13 = vector.load %arg8[%c8, %c0_15] : memref<32x8xf32, #tpu.memory_space<vmem>>, vector<24x8xf32>
    %14 = vector.extract_strided_slice %9 {offsets = [0, 8], sizes = [24, 8], strides = [1, 1]} : vector<32x16xf32> to vector<24x8xf32>
    %15 = arith.addf %13, %14 : vector<24x8xf32>
    %c8_16 = arith.constant 8 : index
    %c0_17 = arith.constant 0 : index
    %16 = vector.load %arg8[%c8_16, %c0_17] : memref<32x8xf32, #tpu.memory_space<vmem>>, vector<24x8xf32>
    tpu.vector_store %arg8[%c8_16, %c0_17], %15 {strides = array<i32>} : memref<32x8xf32, #tpu.memory_space<vmem>>, vector<24x8xf32>,
    %c0_i32 = arith.constant 0 : i32
    %17 = arith.cmpi sgt, %arg1, %c0_i32 : i32
    %18 = arith.extui %17 : i1 to i32
    %c0_i32_18 = arith.constant 0 : i32
    %19 = arith.cmpi ne, %18, %c0_i32_18 : i32
    scf.if %19 {
      %c0_26 = arith.constant 0 : index
      %c0_27 = arith.constant 0 : index
      %36 = vector.load %arg8[%c0_26, %c0_27] : memref<32x8xf32, #tpu.memory_space<vmem>>, vector<8x8xf32>
      %c0_28 = arith.constant 0 : index
      %c0_29 = arith.constant 0 : index
      %c0_30 = arith.constant 0 : index
      %c0_31 = arith.constant 0 : index
      %c0_32 = arith.constant 0 : index
      %37 = vector.load %arg3[%c0_28, %c0_29, %c0_30, %c0_31, %c0_32] : memref<1x1x1x8x8xf32, #tpu.memory_space<vmem>>, vector<1x1x1x8x8xf32>
      %38 = vector.shape_cast %37 : vector<1x1x1x8x8xf32> to vector<8x8xf32>
      %c0_33 = arith.constant 0 : index
      %c8_34 = arith.constant 8 : index
      %39 = vector.load %arg5[%c0_33, %c8_34] : memref<8x16xf32, #tpu.memory_space<vmem>>, vector<8x8xf32>
      %cst_35 = arith.constant dense<0.000000e+00> : vector<8x8xf32>
      %40 = tpu.matmul %38, %39, %cst_35 {dimension_numbers = #tpu.dot_dimension_numbers<[1], [0], [0], [1], [0, 0, 1, 1], [], []>} : vector<8x8xf32>, vector<8x8xf32>, vector<8x8xf32> -> vector<8x8xf32>
      %41 = arith.addf %36, %40 : vector<8x8xf32>
      %c0_36 = arith.constant 0 : index
      %c0_37 = arith.constant 0 : index
      %42 = vector.load %arg8[%c0_36, %c0_37] : memref<32x8xf32, #tpu.memory_space<vmem>>, vector<8x8xf32>
      tpu.vector_store %arg8[%c0_36, %c0_37], %41 {strides = array<i32>} : memref<32x8xf32, #tpu.memory_space<vmem>>, vector<8x8xf32>,
    } else {
    }
    %c0_19 = arith.constant 0 : index
    %c0_20 = arith.constant 0 : index
    %20 = vector.load %arg8[%c0_19, %c0_20] : memref<32x8xf32, #tpu.memory_space<vmem>>, vector<32x8xf32>
    %21 = vector.shape_cast %20 : vector<32x8xf32> to vector<4x8x8xf32>
    %22 = vector.extract_strided_slice %21 {offsets = [0, 0, 0], sizes = [4, 8, 4], strides = [1, 1, 1]} : vector<4x8x8xf32> to vector<4x8x4xf32>
    %23 = vector.extract_strided_slice %22 {offsets = [0, 0, 0], sizes = [4, 1, 4], strides = [1, 1, 1]} : vector<4x8x4xf32> to vector<4x1x4xf32>
    %24 = vector.extract_strided_slice %22 {offsets = [0, 1, 0], sizes = [4, 7, 4], strides = [1, 1, 1]} : vector<4x8x4xf32> to vector<4x7x4xf32>
    %25 = vector.extract_strided_slice %21 {offsets = [0, 0, 4], sizes = [4, 7, 4], strides = [1, 1, 1]} : vector<4x8x8xf32> to vector<4x7x4xf32>
    %26 = arith.addf %24, %25 : vector<4x7x4xf32>
    %27 = tpu.concatenate %23, %26 in 1 : vector<4x1x4xf32>, vector<4x7x4xf32> -> vector<4x8x4xf32>
    %c0_21 = arith.constant 0 : index
    %c0_22 = arith.constant 0 : index
    %28 = vector.load %arg6[%c0_21, %c0_22] : memref<1x4xf32, #tpu.memory_space<vmem>>, vector<1x4xf32>
    %29 = vector.shape_cast %28 : vector<1x4xf32> to vector<1x1x4xf32>
    %30 = vector.broadcast %29 : vector<1x1x4xf32> to vector<4x8x4xf32>
    %31 = arith.addf %27, %30 : vector<4x8x4xf32>
    %32 = vector.shape_cast %31 : vector<4x8x4xf32> to vector<32x4xf32>
    %c0_23 = arith.constant 0 : index
    %c0_24 = arith.constant 0 : index
    %c0_25 = arith.constant 0 : index
    %33 = vector.load %arg7[%c0_23, %c0_24, %c0_25] : memref<1x32x4xf32, #tpu.memory_space<vmem>>, vector<1x32x4xf32>
    %34 = vector.shape_cast %33 : vector<1x32x4xf32> to vector<32x4xf32>
    %35 = vector.shape_cast %32 : vector<32x4xf32> to vector<1x32x4xf32>
    tpu.vector_store %arg7[%c0_23, %c0_24, %c0_25], %35 {strides = array<i32>} : memref<1x32x4xf32, #tpu.memory_space<vmem>>, vector<1x32x4xf32>,
    return
  }
  func.func @transform_0(%arg0: i32, %arg1: i32) -> (i32, i32, i32, i32, i32) {
    %c0_i32 = arith.constant 0 : i32
    %c0_i32_0 = arith.constant 0 : i32
    %c0_i32_1 = arith.constant 0 : i32
    %c0_i32_2 = arith.constant 0 : i32
    return %arg0, %arg1, %c0_i32, %c0_i32_0, %c0_i32_1 : i32, i32, i32, i32, i32
  }
  func.func @transform_1(%arg0: i32, %arg1: i32) -> (i32, i32, i32, i32, i32) {
    %c4_i32 = arith.constant 4 : i32
    %0 = arith.muli %arg1, %c4_i32 : i32
    %c1_i32 = arith.constant 1 : i32
    %1 = arith.subi %0, %c1_i32 : i32
    %c0_i32 = arith.constant 0 : i32
    %2 = arith.maxsi %1, %c0_i32 : i32
    %c1_i32_0 = arith.constant 1 : i32
    %c0_i32_1 = arith.constant 0 : i32
    %c0_i32_2 = arith.constant 0 : i32
    %c0_i32_3 = arith.constant 0 : i32
    return %arg0, %2, %c1_i32_0, %c0_i32_1, %c0_i32_2 : i32, i32, i32, i32, i32
  }
  func.func @transform_2(%arg0: i32, %arg1: i32) -> (i32, i32) {
    %c0_i32 = arith.constant 0 : i32
    %c0_i32_0 = arith.constant 0 : i32
    %c0_i32_1 = arith.constant 0 : i32
    return %c0_i32, %c0_i32_0 : i32, i32
  }
  func.func @transform_3(%arg0: i32, %arg1: i32) -> (i32, i32) {
    %c0_i32 = arith.constant 0 : i32
    %c0_i32_0 = arith.constant 0 : i32
    %c0_i32_1 = arith.constant 0 : i32
    return %c0_i32, %c0_i32_0 : i32, i32
  }
  func.func @transform_4(%arg0: i32, %arg1: i32) -> (i32, i32) {
    %c0_i32 = arith.constant 0 : i32
    %c0_i32_0 = arith.constant 0 : i32
    %c0_i32_1 = arith.constant 0 : i32
    return %c0_i32, %c0_i32_0 : i32, i32
  }
  func.func @transform_5(%arg0: i32, %arg1: i32) -> (i32, i32, i32) {
    %c0_i32 = arith.constant 0 : i32
    %c0_i32_0 = arith.constant 0 : i32
    return %arg0, %arg1, %c0_i32 : i32, i32, i32
  }
}

</mosaic_0001>

<llo_original>
// kernel: downsample_conv2d.1
$region0: #{downsample_conv2d.1}
  #allocation0 [shape = 'u32[]', space=smem, size = 0x4, offset = 0x4, fixed_abs, tag = 'smem constant byte address 0x4 - core index']
  #allocation1 [shape = 'u32[72,128]{1,0:T(1,128)}', space=vmem, size = 0x9000, scoped, tag = 'internal scratch']
  #allocation2 [shape = 'f32[32,8]{1,0:T(8,128)}', space=vmem, size = 0x4000, scoped, tag = 'scratch operand']
  %s0 = inlined_call_operand.vmem [shape: f32[2,8,2,8,8], index: 0, kind: input, shape index: {}, may-alias: {0,1}]
  %s1 = inlined_call_operand.vmem [shape: f32[2,8,2,8,8], index: 1, kind: input, shape index: {}, may-alias: {0,1}]
  %s2 = inlined_call_operand.vmem [shape: f32[8,8], index: 2, kind: input, shape index: {}]
  %s3 = inlined_call_operand.vmem [shape: f32[8,16], index: 3, kind: input, shape index: {}]
  %s4 = inlined_call_operand.vmem [shape: f32[1,4], index: 4, kind: input, shape index: {}]
  %s5 = inlined_call_operand.vmem [shape: f32[2,64,4], index: 5, kind: output, shape index: {}]
  %s6 = sld [smem:[#allocation0]]
  $region57: #{downsample_conv2d.1} parent=0
    _
  %s8 = ssub.s32 1, %s6
  %s9 = scalar_select 0, %s8, %s6
  loop: start=0, step=1, limit=6
  $region2: #{downsample_conv2d.1} parent=0 // loop_pre_header
    _
  $region3: #{downsample_conv2d.1} parent=0 // loop_header
    %s11 = sphi 0, %s15
    %p12 = scmp.ge.s32.totalorder %s11, 6
    %s18 = sphi 0, %s30
    %s19 = sphi 0, %s26
    %s20 = sphi 0, %s18
    %s21 = sphi 0, %s19
    %s22 = sphi 0, %s20
    %s23 = sphi 0, %s21
    %s35 = sphi 0, %s37
    %s38 = sphi 0, %s35
    %s39 = sphi 0, %s38
    %s55 = sphi 0, %s39
    %s71 = sphi 0, %s73
    %s74 = sphi 0, %s71
    %s75 = sphi 0, %s74
    %s91 = sphi 0, %s75
    %s95 = sphi 0, %s95
    %s97 = sphi 0, %s95
    %s98 = sphi 0, %s97
    %s112 = sphi 0, %s98
    %s116 = sphi 0, %s116
    %s118 = sphi 0, %s116
    %s119 = sphi 0, %s118
    %s133 = sphi 0, %s119
    %s137 = sphi 0, %s137
    %s139 = sphi 0, %s137
    %s140 = sphi 0, %s139
    %s154 = sphi 0, %s140
    %s162 = sphi 0, %s164
    %s165 = sphi 0, %s162
    %s166 = sphi 0, %s165
    %s182 = sphi 0, %s166
  $region4: #{downsample_conv2d.1} parent=0 // loop_header_branch
    %14 = sbr.rel (%p12) target = $region8
  $region5: #{downsample_conv2d.1} parent=0 // loop_body
    %s16 = ssub.s32 %s11, 1
    %s17 = ssub.s32 %s11, 2
    %s24 = sadd.s32 1, %s19
    %p25 = scmp.ge.s32.totalorder %s24, 2
    %s26 = scalar_select %p25, 0, %s24
    %s27 = sadd.s32 1, %s18
    %s28 = scalar_select %p25, %s27, %s18
    %p29 = scmp.ge.s32.totalorder %s28, 2
    %s30 = scalar_select %p29, 0, %s28
    %s31 = ssub.s32 %s18, %s30
    %s32 = ssub.s32 %s19, %s26
    %s33 = sor.u32 %s31, %s32
    %p34 = scmp.eq.s32.totalorder %s33, 0
    %s36 = sadd.s32 %s35, 1
    %s37 = scalar_select %p34, %s35, %s36
    %p40 = pneg %p34
    %p41 = scmp.eq.s32.totalorder %s11, 3
    %p42 = por %p40, %p41
    %p43 = scmp.ne.s32.totalorder %s35, %s38
    %p44 = scmp.eq.s32.totalorder %s11, 0
    %p45 = por %p43, %p44
    %p46 = scmp.ne.s32.totalorder %s35, %s38
    %p47 = scmp.eq.s32.totalorder %s16, 3
    %p48 = por %p46, %p47
    %p49 = scmp.ne.s32.totalorder %s38, %s39
    %p50 = scmp.eq.s32.totalorder %s16, 0
    %p51 = por %p49, %p50
    %p52 = scmp.ne.s32.totalorder %s38, %s39
    %p53 = scmp.eq.s32.totalorder %s17, 3
    %p54 = por %p52, %p53
    %p56 = scmp.ne.s32.totalorder %s39, %s55
    %p57 = scmp.eq.s32.totalorder %s17, 0
    %p58 = por %p56, %p57
    %s59 = smul.u32 %s19, 4
    %s60 = ssub.s32 %s59, 1
    %p61 = scmp.gt.s32.totalorder %s60, 0
    %s62 = scalar_select %p61, %s60, 0
    %s63 = smul.u32 %s26, 4
    %s64 = ssub.s32 %s63, 1
    %p65 = scmp.gt.s32.totalorder %s64, 0
    %s66 = scalar_select %p65, %s64, 0
    %s67 = ssub.s32 %s18, %s30
    %s68 = ssub.s32 %s62, %s66
    %s69 = sor.u32 %s67, %s68
    %p70 = scmp.eq.s32.totalorder %s69, 0
    %s72 = sadd.s32 %s71, 1
    %s73 = scalar_select %p70, %s71, %s72
    %p76 = pneg %p70
    %p77 = scmp.eq.s32.totalorder %s11, 3
    %p78 = por %p76, %p77
    %p79 = scmp.ne.s32.totalorder %s71, %s74
    %p80 = scmp.eq.s32.totalorder %s11, 0
    %p81 = por %p79, %p80
    %p82 = scmp.ne.s32.totalorder %s71, %s74
    %p83 = scmp.eq.s32.totalorder %s16, 3
    %p84 = por %p82, %p83
    %p85 = scmp.ne.s32.totalorder %s74, %s75
    %p86 = scmp.eq.s32.totalorder %s16, 0
    %p87 = por %p85, %p86
    %p88 = scmp.ne.s32.totalorder %s74, %s75
    %p89 = scmp.eq.s32.totalorder %s17, 3
    %p90 = por %p88, %p89
    %p92 = scmp.ne.s32.totalorder %s75, %s91
    %p93 = scmp.eq.s32.totalorder %s17, 0
    %p94 = por %p92, %p93
    %s96 = sadd.s32 %s95, 1
    %p99 = scmp.eq.s32.totalorder %s11, 3
    %p100 = scmp.ne.s32.totalorder %s95, %s97
    %p101 = scmp.eq.s32.totalorder %s11, 0
    %p102 = por %p100, %p101
    %p103 = scmp.ne.s32.totalorder %s95, %s97
    %p104 = scmp.eq.s32.totalorder %s16, 3
    %p105 = por %p103, %p104
    %p106 = scmp.ne.s32.totalorder %s97, %s98
    %p107 = scmp.eq.s32.totalorder %s16, 0
    %p108 = por %p106, %p107
    %p109 = scmp.ne.s32.totalorder %s97, %s98
    %p110 = scmp.eq.s32.totalorder %s17, 3
    %p111 = por %p109, %p110
    %p113 = scmp.ne.s32.totalorder %s98, %s112
    %p114 = scmp.eq.s32.totalorder %s17, 0
    %p115 = por %p113, %p114
    %s117 = sadd.s32 %s116, 1
    %p120 = scmp.eq.s32.totalorder %s11, 3
    %p121 = scmp.ne.s32.totalorder %s116, %s118
    %p122 = scmp.eq.s32.totalorder %s11, 0
    %p123 = por %p121, %p122
    %p124 = scmp.ne.s32.totalorder %s116, %s118
    %p125 = scmp.eq.s32.totalorder %s16, 3
    %p126 = por %p124, %p125
    %p127 = scmp.ne.s32.totalorder %s118, %s119
    %p128 = scmp.eq.s32.totalorder %s16, 0
    %p129 = por %p127, %p128
    %p130 = scmp.ne.s32.totalorder %s118, %s119
    %p131 = scmp.eq.s32.totalorder %s17, 3
    %p132 = por %p130, %p131
    %p134 = scmp.ne.s32.totalorder %s119, %s133
    %p135 = scmp.eq.s32.totalorder %s17, 0
    %p136 = por %p134, %p135
    %s138 = sadd.s32 %s137, 1
    %p141 = scmp.eq.s32.totalorder %s11, 3
    %p142 = scmp.ne.s32.totalorder %s137, %s139
    %p143 = scmp.eq.s32.totalorder %s11, 0
    %p144 = por %p142, %p143
    %p145 = scmp.ne.s32.totalorder %s137, %s139
    %p146 = scmp.eq.s32.totalorder %s16, 3
    %p147 = por %p145, %p146
    %p148 = scmp.ne.s32.totalorder %s139, %s140
    %p149 = scmp.eq.s32.totalorder %s16, 0
    %p150 = por %p148, %p149
    %p151 = scmp.ne.s32.totalorder %s139, %s140
    %p152 = scmp.eq.s32.totalorder %s17, 3
    %p153 = por %p151, %p152
    %p155 = scmp.ne.s32.totalorder %s140, %s154
    %p156 = scmp.eq.s32.totalorder %s17, 0
    %p157 = por %p155, %p156
    %s158 = ssub.s32 %s18, %s30
    %s159 = ssub.s32 %s19, %s26
    %s160 = sor.u32 %s158, %s159
    %p161 = scmp.eq.s32.totalorder %s160, 0
    %s163 = sadd.s32 %s162, 1
    %s164 = scalar_select %p161, %s162, %s163
    %p167 = pneg %p161
    %p168 = scmp.eq.s32.totalorder %s11, 3
    %p169 = por %p167, %p168
    %p170 = scmp.ne.s32.totalorder %s162, %s165
    %p171 = scmp.eq.s32.totalorder %s11, 0
    %p172 = por %p170, %p171
    %p173 = scmp.ne.s32.totalorder %s162, %s165
    %p174 = scmp.eq.s32.totalorder %s16, 3
    %p175 = por %p173, %p174
    %p176 = scmp.ne.s32.totalorder %s165, %s166
    %p177 = scmp.eq.s32.totalorder %s16, 0
    %p178 = por %p176, %p177
    %p179 = scmp.ne.s32.totalorder %s165, %s166
    %p180 = scmp.eq.s32.totalorder %s17, 3
    %p181 = por %p179, %p180
    %p183 = scmp.ne.s32.totalorder %s166, %s182
    %p184 = scmp.eq.s32.totalorder %s17, 0
    %p185 = por %p183, %p184
    %p186 = scmp.le.s32.totalorder 1, %s11
    %p187 = scmp.lt.s32.totalorder %s11, 5
    %p188 = pnand %p186, %p187
    %p189 = pneg %p188
    // Predicated region
    $region9: #{downsample_conv2d.1} parent=5 // pred_check
      _
    $region10: #{downsample_conv2d.1} parent=5 // pred_check_branch
      %191 = sbr.rel (%p188) target = $region12
    $region11: #{downsample_conv2d.1} parent=5 // pred_region
      %s192 = ssub.s32 %s11, 1
      // Predicated region
      $region13: #{downsample_conv2d.1} parent=11 // pred_check
        %p193 = pneg %p108
      $region14: #{downsample_conv2d.1} parent=11 // pred_check_branch
        %195 = sbr.rel (%p193) target = $region16
      $region15: #{downsample_conv2d.1} parent=11 // pred_region
        _
      $region16: #{downsample_conv2d.1} parent=11 // pred_fallthru
        _
      // Predicated region
      $region17: #{downsample_conv2d.1} parent=11 // pred_check
        %p196 = pneg %p129
      $region18: #{downsample_conv2d.1} parent=11 // pred_check_branch
        %198 = sbr.rel (%p196) target = $region20
      $region19: #{downsample_conv2d.1} parent=11 // pred_region
        _
      $region20: #{downsample_conv2d.1} parent=11 // pred_fallthru
        _
      // Predicated region
      $region21: #{downsample_conv2d.1} parent=11 // pred_check
        %p199 = pneg %p150
      $region22: #{downsample_conv2d.1} parent=11 // pred_check_branch
        %201 = sbr.rel (%p199) target = $region24
      $region23: #{downsample_conv2d.1} parent=11 // pred_region
        _
      $region24: #{downsample_conv2d.1} parent=11 // pred_fallthru
        _
    $region12: #{downsample_conv2d.1} parent=5 // pred_fallthru
      _
    %p202 = scmp.lt.s32.totalorder %s11, 4
    // Predicated region
    $region25: #{downsample_conv2d.1} parent=5 // pred_check
      %p203 = pneg %p202
    $region26: #{downsample_conv2d.1} parent=5 // pred_check_branch
      %205 = sbr.rel (%p203) target = $region28
    $region27: #{downsample_conv2d.1} parent=5 // pred_region
      // Predicated region
      $region29: #{downsample_conv2d.1} parent=27 // pred_check
        %p206 = pneg %p45
      $region30: #{downsample_conv2d.1} parent=27 // pred_check_branch
        %208 = sbr.rel (%p206) target = $region32
      $region31: #{downsample_conv2d.1} parent=27 // pred_region
        %s209 = smul.u32 4, %s19
        %p210 = scmp.lt.s32.totalorder %s18, 1
        %s211 = scalar_select %p210, %s18, 1
        %p212 = scmp.lt.s32.totalorder %s209, 7
        %s213 = scalar_select %p212, %s209, 7
        %s214 = smul.addr %s213, 2
        %s215 = smul.addr %s211, 16
        %s216 = sadd.s32 %s214, %s215
        %s217 = smul.addr %s216, 8
        %s218 = scalar_lea.vmem %s0, %s217
        %s219 = smul.u32 4, %s19
      $region32: #{downsample_conv2d.1} parent=27 // pred_fallthru
        _
      // Predicated region
      $region33: #{downsample_conv2d.1} parent=27 // pred_check
        %p220 = pneg %p81
      $region34: #{downsample_conv2d.1} parent=27 // pred_check_branch
        %222 = sbr.rel (%p220) target = $region36
      $region35: #{downsample_conv2d.1} parent=27 // pred_region
        %s223 = smul.u32 %s19, 4
        %s224 = ssub.s32 %s223, 1
        %p225 = scmp.gt.s32.totalorder %s224, 0
        %s226 = scalar_select %p225, %s224, 0
        %p227 = scmp.lt.s32.totalorder %s18, 1
        %s228 = scalar_select %p227, %s18, 1
        %p229 = scmp.lt.s32.totalorder %s226, 7
        %s230 = scalar_select %p229, %s226, 7
        %s231 = smul.addr %s230, 2
        %s232 = sadd.s32 1, %s231
        %s233 = smul.addr %s228, 16
        %s234 = sadd.s32 %s232, %s233
        %s235 = smul.addr %s234, 8
        %s236 = scalar_lea.vmem %s1, %s235
        %s237 = smul.u32 %s19, 4
        %s238 = ssub.s32 %s237, 1
        %p239 = scmp.gt.s32.totalorder %s238, 0
        %s240 = scalar_select %p239, %s238, 0
      $region36: #{downsample_conv2d.1} parent=27 // pred_fallthru
        _
    $region28: #{downsample_conv2d.1} parent=5 // pred_fallthru
      _
    %p241 = scmp.le.s32.totalorder 1, %s11
    %p242 = scmp.lt.s32.totalorder %s11, 5
    %p243 = pnand %p241, %p242
    %p244 = pneg %p243
    // Predicated region
    $region37: #{downsample_conv2d.1} parent=5 // pred_check
      _
    $region38: #{downsample_conv2d.1} parent=5 // pred_check_branch
      %246 = sbr.rel (%p243) target = $region40
    $region39: #{downsample_conv2d.1} parent=5 // pred_region
      %s247 = ssub.s32 %s11, 1
      %s248 = smul.u32 4, %s21
      %p249 = scmp.lt.s32.totalorder %s20, 1
      %s250 = scalar_select %p249, %s20, 1
      %p251 = scmp.lt.s32.totalorder %s248, 7
      %s252 = scalar_select %p251, %s248, 7
      %s253 = smul.addr %s252, 2
      %s254 = smul.addr %s250, 16
      %s255 = sadd.s32 %s253, %s254
      %s256 = smul.addr %s255, 8
      %s257 = scalar_lea.vmem %s0, %s256
      %p258 = pneg %p51
      %p259 = pneg %p48
      %s260 = smul.u32 %s21, 4
      %s261 = ssub.s32 %s260, 1
      %p262 = scmp.gt.s32.totalorder %s261, 0
      %s263 = scalar_select %p262, %s261, 0
      %p264 = scmp.lt.s32.totalorder %s20, 1
      %s265 = scalar_select %p264, %s20, 1
      %p266 = scmp.lt.s32.totalorder %s263, 7
      %s267 = scalar_select %p266, %s263, 7
      %s268 = smul.addr %s267, 2
      %s269 = sadd.s32 1, %s268
      %s270 = smul.addr %s265, 16
      %s271 = sadd.s32 %s269, %s270
      %s272 = smul.addr %s271, 8
      %s273 = scalar_lea.vmem %s1, %s272
      %p274 = pneg %p87
      %p275 = pneg %p84
      %p276 = pneg %p108
      %p277 = pneg %p105
      %p278 = pneg %p129
      %p279 = pneg %p126
      %p280 = pneg %p150
      %p281 = pneg %p147
      %p282 = pneg %p178
      %p283 = pneg %p175
      %s284 = smul.u32 4, %s21
      %p285 = scmp.lt.s32.totalorder %s20, 1
      %s286 = scalar_select %p285, %s20, 1
      %p287 = scmp.lt.s32.totalorder %s284, 7
      %s288 = scalar_select %p287, %s284, 7
      %s289 = smul.addr %s286, 8
      %s290 = sadd.s32 %s288, %s289
      %s291 = smul.addr %s290, 8
      %s292 = scalar_lea.vmem %s5, %s291
      %s293 = smul.u32 4, %s21
      %p294 = scmp.lt.s32.totalorder %s20, 1
      %s295 = scalar_select %p294, %s20, 1
      %p296 = scmp.lt.s32.totalorder %s293, 7
      %s297 = scalar_select %p296, %s293, 7
      %s298 = smul.addr %s297, 2
      %s299 = smul.addr %s295, 16
      %s300 = sadd.s32 %s298, %s299
      %s301 = smul.addr %s300, 8
      %s302 = scalar_lea.vmem %s0, %s301
      %s303 = smul.u32 4, %s21
      %s304 = smul.u32 %s21, 4
      %s305 = ssub.s32 %s304, 1
      %p306 = scmp.gt.s32.totalorder %s305, 0
      %s307 = scalar_select %p306, %s305, 0
      %p308 = scmp.lt.s32.totalorder %s20, 1
      %s309 = scalar_select %p308, %s20, 1
      %p310 = scmp.lt.s32.totalorder %s307, 7
      %s311 = scalar_select %p310, %s307, 7
      %s312 = smul.addr %s311, 2
      %s313 = sadd.s32 1, %s312
      %s314 = smul.addr %s309, 16
      %s315 = sadd.s32 %s313, %s314
      %s316 = smul.addr %s315, 8
      %s317 = scalar_lea.vmem %s1, %s316
      %s318 = smul.u32 %s21, 4
      %s319 = ssub.s32 %s318, 1
      %p320 = scmp.gt.s32.totalorder %s319, 0
      %s321 = scalar_select %p320, %s319, 0
      %s322 = smul.u32 4, %s21
      %p323 = scmp.lt.s32.totalorder %s20, 1
      %s324 = scalar_select %p323, %s20, 1
      %p325 = scmp.lt.s32.totalorder %s322, 7
      %s326 = scalar_select %p325, %s322, 7
      %s327 = smul.addr %s324, 8
      %s328 = sadd.s32 %s326, %s327
      %s329 = smul.addr %s328, 8
      %s330 = scalar_lea.vmem %s5, %s329
      %s331 = smul.u32 4, %s21
      %v332 = vld [vmem:[%s302] sm:$0xff]
      %v333 = vld [vmem:[%s302 + $0x10] sm:$0xff]
      %v334 = vld [vmem:[%s302 + $0x20] sm:$0xff]
      %v335 = vld [vmem:[%s302 + $0x30] sm:$0xff]
      %s336 = scalar_lea.vmem %s302, 8
      %v337 = vld [vmem:[%s336] sm:$0xff]
      %v338 = vld [vmem:[%s336 + $0x10] sm:$0xff]
      %v339 = vld [vmem:[%s336 + $0x20] sm:$0xff]
      %v340 = vld [vmem:[%s336 + $0x30] sm:$0xff]
      %v341 = vld [vmem:[%s2] sm:$0xff]
      %v342 = vld [vmem:[%s3] sm:$0xff]
      %vm343 = vcmask 64512
      %v345 = vsel %vm343, %v337, 0
      %v348 = vsel %vm343, %v338, 0
      %v351 = vsel %vm343, %v339, 0
      %v354 = vsel %vm343, %v340, 0
      %356 = vmatpush.msra.mxu0 0.0
      %357 = vmatpush.msra.mxu0 0.0
      %358 = vmatpush.msra.mxu0 0.0
      %359 = vmatpush.msra.mxu0 0.0
      %360 = vmatpush.msra.mxu0 0.0
      %361 = vmatpush.msra.mxu0 0.0
      %362 = vmatpush.msra.mxu0 0.0
      %363 = vmatpush.msra.mxu0 0.0
      %364 = vmatpush.msra.mxu0 0.0
      %365 = vmatpush.msra.mxu0 0.0
      %366 = vmatpush.msra.mxu0 0.0
      %367 = vmatpush.msra.mxu0 0.0
      %368 = vmatpush.msra.mxu0 0.0
      %369 = vmatpush.msra.mxu0 0.0
      %370 = vmatpush.msra.mxu0 0.0
      %371 = vmatpush.msra.mxu0 %v342
      %372 = vmatmul.f32.gmra.mxu0 %v345
      %v373 = vpop.f32.mrf.mxu0
      %v374 = vadd.f32 0.0, %v373
      %375 = vmatmul.f32.gmra.mxu0 %v348
      %v376 = vpop.f32.mrf.mxu0
      %v377 = vadd.f32 0.0, %v376
      %378 = vmatmul.f32.gmra.mxu0 %v351
      %v379 = vpop.f32.mrf.mxu0
      %v380 = vadd.f32 0.0, %v379
      %381 = vmatmul.f32.gmra.mxu0 %v354
      %v382 = vpop.f32.mrf.mxu0
      %v383 = vadd.f32 0.0, %v382
      %384 = vdwg.mxu0
      %v386 = vsel %vm343, %v332, 0
      %v389 = vsel %vm343, %v333, 0
      %v392 = vsel %vm343, %v334, 0
      %v395 = vsel %vm343, %v335, 0
      %397 = vmatpush.msra.mxu0 0.0
      %398 = vmatpush.msra.mxu0 0.0
      %399 = vmatpush.msra.mxu0 0.0
      %400 = vmatpush.msra.mxu0 0.0
      %401 = vmatpush.msra.mxu0 0.0
      %402 = vmatpush.msra.mxu0 0.0
      %403 = vmatpush.msra.mxu0 0.0
      %404 = vmatpush.msra.mxu0 0.0
      %405 = vmatpush.msra.mxu0 0.0
      %406 = vmatpush.msra.mxu0 0.0
      %407 = vmatpush.msra.mxu0 0.0
      %408 = vmatpush.msra.mxu0 0.0
      %409 = vmatpush.msra.mxu0 0.0
      %410 = vmatpush.msra.mxu0 0.0
      %411 = vmatpush.msra.mxu0 0.0
      %412 = vmatpush.msra.mxu0 %v341
      %413 = vmatmul.f32.gmra.mxu0 %v386
      %v414 = vpop.f32.mrf.mxu0
      %v415 = vadd.f32 %v374, %v414
      %416 = vmatmul.f32.gmra.mxu0 %v389
      %v417 = vpop.f32.mrf.mxu0
      %v418 = vadd.f32 %v377, %v417
      %419 = vmatmul.f32.gmra.mxu0 %v392
      %v420 = vpop.f32.mrf.mxu0
      %v421 = vadd.f32 %v380, %v420
      %422 = vmatmul.f32.gmra.mxu0 %v395
      %v423 = vpop.f32.mrf.mxu0
      %v424 = vadd.f32 %v383, %v423
      %425 = vdwg.mxu0
      %426 = vst.msk [vmem:[#allocation2] sm:$0xff] %vm343, %v415
      %427 = vst.msk [vmem:[#allocation2 + $0x8] sm:$0xff] %vm343, %v418
      %428 = vst.msk [vmem:[#allocation2 + $0x10] sm:$0xff] %vm343, %v421
      %429 = vst.msk [vmem:[#allocation2 + $0x18] sm:$0xff] %vm343, %v424
      %v430 = vld [vmem:[#allocation2 + $0x8] sm:$0xff]
      %v431 = vld [vmem:[#allocation2 + $0x10] sm:$0xff]
      %v432 = vld [vmem:[#allocation2 + $0x18] sm:$0xff]
      %436 = vrot.lane.b32.xlu0 %v374, 120
      %v437 = vpop.permute.xlu0 %436
      %438 = vrot.lane.b32.xlu0 %v377, 120
      %v439 = vpop.permute.xlu0 %438
      %440 = vrot.lane.b32.xlu0 %v380, 120
      %v441 = vpop.permute.xlu0 %440
      %v445 = vadd.f32 %v430, %v437
      %v446 = vadd.f32 %v431, %v439
      %v447 = vadd.f32 %v432, %v441
      %448 = vst.msk [vmem:[#allocation2 + $0x8] sm:$0xff] %vm343, %v445
      %449 = vst.msk [vmem:[#allocation2 + $0x10] sm:$0xff] %vm343, %v446
      %450 = vst.msk [vmem:[#allocation2 + $0x18] sm:$0xff] %vm343, %v447
      %p451 = scmp.gt.s32.totalorder %s21, 0
      // Predicated region
      $region41: #{downsample_conv2d.1} parent=39 // pred_check
        %p452 = pneg %p451
      $region42: #{downsample_conv2d.1} parent=39 // pred_check_branch
        %454 = sbr.rel (%p452) target = $region44
      $region43: #{downsample_conv2d.1} parent=39 // pred_region
        %v455 = vld [vmem:[#allocation2] sm:$0xff]
        %v456 = vld [vmem:[%s317] sm:$0xff]
        %v457 = vld [vmem:[%s3] sm:$0xff]
        %459 = vrot.lane.b32.xlu0 %v457, 120
        %v460 = vpop.permute.xlu0 %459
        %v463 = vsel %vm343, %v456, 0
        %465 = vmatpush.msra.mxu0 0.0
        %466 = vmatpush.msra.mxu0 0.0
        %467 = vmatpush.msra.mxu0 0.0
        %468 = vmatpush.msra.mxu0 0.0
        %469 = vmatpush.msra.mxu0 0.0
        %470 = vmatpush.msra.mxu0 0.0
        %471 = vmatpush.msra.mxu0 0.0
        %472 = vmatpush.msra.mxu0 0.0
        %473 = vmatpush.msra.mxu0 0.0
        %474 = vmatpush.msra.mxu0 0.0
        %475 = vmatpush.msra.mxu0 0.0
        %476 = vmatpush.msra.mxu0 0.0
        %477 = vmatpush.msra.mxu0 0.0
        %478 = vmatpush.msra.mxu0 0.0
        %479 = vmatpush.msra.mxu0 0.0
        %480 = vmatpush.msra.mxu0 %v460
        %481 = vmatmul.f32.gmra.mxu0 %v463
        %v482 = vpop.f32.mrf.mxu0
        %v483 = vadd.f32 0.0, %v482
        %484 = vdwg.mxu0
        %v485 = vadd.f32 %v455, %v483
        %486 = vst.msk [vmem:[#allocation2] sm:$0xff] %vm343, %v485
      $region44: #{downsample_conv2d.1} parent=39 // pred_fallthru
        _
      %v487 = vld [vmem:[#allocation2] sm:$0xff]
      %v488 = vld [vmem:[#allocation2 + $0x8] sm:$0xff]
      %v489 = vld [vmem:[#allocation2 + $0x10] sm:$0xff]
      %v490 = vld [vmem:[#allocation2 + $0x18] sm:$0xff]
      %v495 = vrot.slane %v487, 7
      %v496 = vrot.slane %v488, 7
      %v497 = vrot.slane %v489, 7
      %v498 = vrot.slane %v490, 7
      %499 = vrot.lane.b32.xlu0 %v495, 124
      %v500 = vpop.permute.xlu0 %499
      %501 = vrot.lane.b32.xlu0 %v496, 124
      %v502 = vpop.permute.xlu0 %501
      %503 = vrot.lane.b32.xlu0 %v497, 124
      %v504 = vpop.permute.xlu0 %503
      %505 = vrot.lane.b32.xlu0 %v498, 124
      %v506 = vpop.permute.xlu0 %505
      %v511 = vadd.f32 %v487, %v500
      %v512 = vadd.f32 %v488, %v502
      %v513 = vadd.f32 %v489, %v504
      %v514 = vadd.f32 %v490, %v506
      %vm515 = vcmask 1040384
      %v516 = vsel %vm515, %v487, %v511
      %v517 = vsel %vm515, %v488, %v512
      %v518 = vsel %vm515, %v489, %v513
      %v519 = vsel %vm515, %v490, %v514
      %v520 = vld [vmem:[%s4] sm:$0x1]
      %v522 = vperm.slane %v520, 0
      %v524 = vadd.f32 %v516, %v522
      %v525 = vadd.f32 %v517, %v522
      %v526 = vadd.f32 %v518, %v522
      %v527 = vadd.f32 %v519, %v522
      %vm528 = vcmask 31744
      %529 = vst.msk [vmem:[%s330] sm:$0xff] %vm528, %v524
      %530 = vst.msk [vmem:[%s330 + $0x8] sm:$0xff] %vm528, %v525
      %531 = vst.msk [vmem:[%s330 + $0x10] sm:$0xff] %vm528, %v526
      %532 = vst.msk [vmem:[%s330 + $0x18] sm:$0xff] %vm528, %v527
      %s533 = smul.u32 4, %s21
      %p534 = scmp.lt.s32.totalorder %s20, 1
      %s535 = scalar_select %p534, %s20, 1
      %p536 = scmp.lt.s32.totalorder %s533, 7
      %s537 = scalar_select %p536, %s533, 7
      %s538 = smul.addr %s535, 8
      %s539 = sadd.s32 %s537, %s538
      %s540 = smul.addr %s539, 8
      %s541 = scalar_lea.vmem %s5, %s540
      // Predicated region
      $region45: #{downsample_conv2d.1} parent=39 // pred_check
        %p542 = pneg %p175
      $region46: #{downsample_conv2d.1} parent=39 // pred_check_branch
        %544 = sbr.rel (%p542) target = $region48
      $region47: #{downsample_conv2d.1} parent=39 // pred_region
        %s545 = smul.u32 4, %s21
      $region48: #{downsample_conv2d.1} parent=39 // pred_fallthru
        _
    $region40: #{downsample_conv2d.1} parent=5 // pred_fallthru
      _
    %p546 = scmp.le.s32.totalorder 2, %s11
    // Predicated region
    $region49: #{downsample_conv2d.1} parent=5 // pred_check
      %p547 = pneg %p546
    $region50: #{downsample_conv2d.1} parent=5 // pred_check_branch
      %549 = sbr.rel (%p547) target = $region52
    $region51: #{downsample_conv2d.1} parent=5 // pred_region
      %s550 = ssub.s32 %s11, 2
      // Predicated region
      $region53: #{downsample_conv2d.1} parent=51 // pred_check
        %p551 = pneg %p181
      $region54: #{downsample_conv2d.1} parent=51 // pred_check_branch
        %553 = sbr.rel (%p551) target = $region56
      $region55: #{downsample_conv2d.1} parent=51 // pred_region
        %s554 = smul.u32 4, %s23
        %p555 = scmp.lt.s32.totalorder %s22, 1
        %s556 = scalar_select %p555, %s22, 1
        %p557 = scmp.lt.s32.totalorder %s554, 7
        %s558 = scalar_select %p557, %s554, 7
        %s559 = smul.addr %s556, 8
        %s560 = sadd.s32 %s558, %s559
        %s561 = smul.addr %s560, 8
        %s562 = scalar_lea.vmem %s5, %s561
      $region56: #{downsample_conv2d.1} parent=51 // pred_fallthru
        _
    $region52: #{downsample_conv2d.1} parent=5 // pred_fallthru
      _
  $region6: #{downsample_conv2d.1} parent=0 // loop_footer
    %s15 = sadd.s32 1, %s11
  $region7: #{downsample_conv2d.1} parent=0 // loop_footer_branch
    %10 = sbr.rel target = $region3
  $region8: #{downsample_conv2d.1} parent=0 // loop_exit
    _

</llo_original>
